<compile_context>
chip_gen: v5e
topology: v5e:2x2
jax: 0.10.0
libtpu: 0.0.40
codegen_flags: <defaults>
</compile_context>

<pallas_src>
import jax
import jax.numpy as jnp
from jax.experimental import pallas as pl

F = 10   # feature dim of every Linear(10, 10)
B = 10   # batch = 10 so the (10, 10) parameter `p` broadcasts exactly as in PyTorch


def toy_model_kernel(x_ref, y_ref, w1_ref, w2_ref, c_ref, b_ref, out_ref, bnew_ref):
    x = x_ref[...]                                      # (B, F)
    y = y_ref[...]                                      # (B, F)

    # buffer side effect: b_new = b + x.sum() + y.sum()
    bnew_ref[...] = b_ref[...] + (jnp.sum(x) + jnp.sum(y))

    # out = p + seq1(x) + seq2(y) == const + x @ W1_eff + y @ W2_eff   (two MXU pushes)
    out_ref[...] = (
        c_ref[...]
        + jnp.dot(x, w1_ref[...], preferred_element_type=jnp.float32)
        + jnp.dot(y, w2_ref[...], preferred_element_type=jnp.float32)
    )


def fold_params(params):
    """One-time precompute (module-init analogue, NOT per-call work).

    `params` holds PyTorch-style Linear weights w* of shape (out, in), biases (F,),
    and the (10, 10) parameter p.  Returns:
      w1_eff, w2_eff : (F, F) effective weights of each folded Sequential
      const          : (B, F) = p + folded biases of both Sequentials
    """
    w1_eff = params["w1a"].T @ params["w1b"].T
    w2_eff = params["w2a"].T @ params["w2b"].T
    bias_eff = (params["b1a"] @ params["w1b"].T + params["b1b"]
                + params["b2a"] @ params["w2b"].T + params["b2b"])
    const = params["p"] + bias_eff[None, :]
    return w1_eff, w2_eff, const


@jax.jit
def toy_model_forward(x, y, w1_eff, w2_eff, const, b):
    """Returns (out, b_new): out = p + seq1(x) + seq2(y), b_new = b + x.sum() + y.sum()."""
    full = lambda shape: pl.BlockSpec(shape, lambda: (0,) * len(shape))
    b2d = b.reshape(1, 1)                               # shape plumbing only (inside jit)

    out, b_new = pl.pallas_call(
        toy_model_kernel,
        out_shape=(
            jax.ShapeDtypeStruct((B, F), jnp.float32),
            jax.ShapeDtypeStruct((1, 1), jnp.float32),
        ),
        grid=(),
        in_specs=[
            full((B, F)),    # x
            full((B, F)),    # y
            full((F, F)),    # W1_eff
            full((F, F)),    # W2_eff
            full((B, F)),    # const = p + folded biases
            full((1, 1)),    # b (incoming buffer)
        ],
        out_specs=(
            full((B, F)),
            full((1, 1)),
        ),
        # buffer updated "in place": incoming b aliases the b_new output (P8)
        input_output_aliases={5: 1},
    )(x, y, w1_eff, w2_eff, const, b2d)

    return out, b_new.reshape(1)


def _reference(x, y, b, params):
    """Unfused pure-JAX reference mirroring the PyTorch module."""
    def lin(h, w, bias):
        return h @ w.T + bias

    s1 = lin(lin(x, params["w1a"], params["b1a"]), params["w1b"], params["b1b"])
    s2 = lin(lin(y, params["w2a"], params["b2a"]), params["w2b"], params["b2b"])
    out = params["p"] + s1 + s2
    b_new = b + (x.sum() + y.sum())
    return out, b_new


if __name__ == "__main__":
    key = jax.random.PRNGKey(0)
    keys = jax.random.split(key, 12)

    x = jax.random.normal(keys[0], (B, F), jnp.float32)
    y = jax.random.normal(keys[1], (B, F), jnp.float32)

    # deterministic parameter init (synthetic; shapes from nn.Linear(10,10) and nn.Parameter(10,10))
    params = {
        "w1a": jax.random.normal(keys[2], (F, F), jnp.float32) * 0.1,
        "b1a": jax.random.normal(keys[3], (F,), jnp.float32) * 0.1,
        "w1b": jax.random.normal(keys[4], (F, F), jnp.float32) * 0.1,
        "b1b": jax.random.normal(keys[5], (F,), jnp.float32) * 0.1,
        "w2a": jax.random.normal(keys[6], (F, F), jnp.float32) * 0.1,
        "b2a": jax.random.normal(keys[7], (F,), jnp.float32) * 0.1,
        "w2b": jax.random.normal(keys[8], (F, F), jnp.float32) * 0.1,
        "b2b": jax.random.normal(keys[9], (F,), jnp.float32) * 0.1,
        "p": jax.random.normal(keys[10], (F, F), jnp.float32),
    }

    # One-time parameter folding (module init, not per-forward work).
    w1_eff, w2_eff, const = fold_params(params)
    w1_eff, w2_eff, const = jax.block_until_ready((w1_eff, w2_eff, const))

    b = jnp.zeros((1,), jnp.float32)                    # self.b = torch.zeros(1)

    out, b_new = toy_model_forward(x, y, w1_eff, w2_eff, const, b)
    out = jax.block_until_ready(out)
    b_new = jax.block_until_ready(b_new)

    ref_out, ref_b = _reference(x, y, b, params)
    assert jnp.allclose(out, ref_out, atol=1e-4, rtol=1e-4), "output mismatch"
    assert jnp.allclose(b_new, ref_b, atol=1e-3, rtol=1e-4), "buffer mismatch"

    # second forward to exercise buffer accumulation (b += ... across calls)
    out2, b_new2 = toy_model_forward(x, y, w1_eff, w2_eff, const, b_new)
    out2, b_new2 = jax.block_until_ready((out2, b_new2))
    ref_out2, ref_b2 = _reference(x, y, ref_b, params)
    assert jnp.allclose(out2, ref_out2, atol=1e-4, rtol=1e-4), "output mismatch (call 2)"
    assert jnp.allclose(b_new2, ref_b2, atol=1e-3, rtol=1e-4), "buffer mismatch (call 2)"

    print("KERNEL_OK")
</pallas_src>

<mosaic_0001>
module attributes {stable_mosaic.version = 11 : i64} {
  func.func @toy_model_kernel(%arg0: memref<10x10xf32, #tpu.memory_space<vmem>>, %arg1: memref<10x10xf32, #tpu.memory_space<vmem>>, %arg2: memref<10x10xf32, #tpu.memory_space<vmem>>, %arg3: memref<10x10xf32, #tpu.memory_space<vmem>>, %arg4: memref<10x10xf32, #tpu.memory_space<vmem>>, %arg5: memref<1x1xf32, #tpu.memory_space<vmem>>, %arg6: memref<10x10xf32, #tpu.memory_space<vmem>>, %arg7: memref<1x1xf32, #tpu.memory_space<vmem>>) attributes {dimension_semantics = [], scalar_prefetch = 0 : i64, scratch_operands = 0 : i64, tpu.core_type = #tpu.core_type<tc>} {
    %c0 = arith.constant 0 : index
    %c0_0 = arith.constant 0 : index
    %0 = vector.load %arg0[%c0, %c0_0] : memref<10x10xf32, #tpu.memory_space<vmem>>, vector<10x10xf32>
    %c0_1 = arith.constant 0 : index
    %c0_2 = arith.constant 0 : index
    %1 = vector.load %arg1[%c0_1, %c0_2] : memref<10x10xf32, #tpu.memory_space<vmem>>, vector<10x10xf32>
    %c0_3 = arith.constant 0 : index
    %c0_4 = arith.constant 0 : index
    %2 = vector.load %arg5[%c0_3, %c0_4] : memref<1x1xf32, #tpu.memory_space<vmem>>, vector<1x1xf32>
    %3 = vector.shape_cast %0 : vector<10x10xf32> to vector<1x10x10xf32>
    %cst = arith.constant dense<0.000000e+00> : vector<1xf32>
    %4 = vector.multi_reduction <add>, %3, %cst [1, 2] : vector<1x10x10xf32> to vector<1xf32>
    %5 = vector.shape_cast %4 : vector<1xf32> to vector<1x1x1xf32>
    %6 = vector.extract %5[0, 0, 0] : f32 from vector<1x1x1xf32>
    %7 = vector.shape_cast %1 : vector<10x10xf32> to vector<1x10x10xf32>
    %cst_5 = arith.constant dense<0.000000e+00> : vector<1xf32>
    %8 = vector.multi_reduction <add>, %7, %cst_5 [1, 2] : vector<1x10x10xf32> to vector<1xf32>
    %9 = vector.shape_cast %8 : vector<1xf32> to vector<1x1x1xf32>
    %10 = vector.extract %9[0, 0, 0] : f32 from vector<1x1x1xf32>
    %11 = arith.addf %6, %10 : f32
    %12 = vector.broadcast %11 : f32 to vector<1x1xf32>
    %13 = arith.addf %2, %12 : vector<1x1xf32>
    %c0_6 = arith.constant 0 : index
    %c0_7 = arith.constant 0 : index
    %14 = vector.load %arg7[%c0_6, %c0_7] : memref<1x1xf32, #tpu.memory_space<vmem>>, vector<1x1xf32>
    tpu.vector_store %arg7[%c0_6, %c0_7], %13 {strides = array<i32>} : memref<1x1xf32, #tpu.memory_space<vmem>>, vector<1x1xf32>,
    %c0_8 = arith.constant 0 : index
    %c0_9 = arith.constant 0 : index
    %15 = vector.load %arg4[%c0_8, %c0_9] : memref<10x10xf32, #tpu.memory_space<vmem>>, vector<10x10xf32>
    %c0_10 = arith.constant 0 : index
    %c0_11 = arith.constant 0 : index
    %16 = vector.load %arg2[%c0_10, %c0_11] : memref<10x10xf32, #tpu.memory_space<vmem>>, vector<10x10xf32>
    %cst_12 = arith.constant dense<0.000000e+00> : vector<10x10xf32>
    %17 = tpu.matmul %0, %16, %cst_12 {dimension_numbers = #tpu.dot_dimension_numbers<[1], [0], [0], [1], [0, 0, 1, 1], [], []>} : vector<10x10xf32>, vector<10x10xf32>, vector<10x10xf32> -> vector<10x10xf32>
    %18 = arith.addf %15, %17 : vector<10x10xf32>
    %c0_13 = arith.constant 0 : index
    %c0_14 = arith.constant 0 : index
    %19 = vector.load %arg3[%c0_13, %c0_14] : memref<10x10xf32, #tpu.memory_space<vmem>>, vector<10x10xf32>
    %cst_15 = arith.constant dense<0.000000e+00> : vector<10x10xf32>
    %20 = tpu.matmul %1, %19, %cst_15 {dimension_numbers = #tpu.dot_dimension_numbers<[1], [0], [0], [1], [0, 0, 1, 1], [], []>} : vector<10x10xf32>, vector<10x10xf32>, vector<10x10xf32> -> vector<10x10xf32>
    %21 = arith.addf %18, %20 : vector<10x10xf32>
    %c0_16 = arith.constant 0 : index
    %c0_17 = arith.constant 0 : index
    %22 = vector.load %arg6[%c0_16, %c0_17] : memref<10x10xf32, #tpu.memory_space<vmem>>, vector<10x10xf32>
    tpu.vector_store %arg6[%c0_16, %c0_17], %21 {strides = array<i32>} : memref<10x10xf32, #tpu.memory_space<vmem>>, vector<10x10xf32>,
    return
  }
}

</mosaic_0001>

<llo_original>
// kernel: toy_model_forward.1
$region0: #{toy_model_forward.1}
  #allocation0 [shape = 'u32[]', space=smem, size = 0x4, offset = 0x4, fixed_abs, tag = 'smem constant byte address 0x4 - core index']
  #allocation1 [shape = 'u32[72,128]{1,0:T(1,128)}', space=vmem, size = 0x9000, scoped, tag = 'internal scratch']
  #allocation2 [shape = 'f32[1,1]{1,0:T(1,128)S(1)}', space=vmem, size = 0x200, scoped, tag = 'scoped memory for toy_model_forward.1']
  %s0 = inlined_call_operand.hbm [shape: f32[10,10], index: 0, kind: input, shape index: {}]
  %s1 = inlined_call_operand.hbm [shape: f32[10,10], index: 1, kind: input, shape index: {}]
  %s2 = inlined_call_operand.hbm [shape: f32[10,10], index: 2, kind: input, shape index: {}]
  %s3 = inlined_call_operand.hbm [shape: f32[10,10], index: 3, kind: input, shape index: {}]
  %s4 = inlined_call_operand.hbm [shape: f32[10,10], index: 4, kind: input, shape index: {}]
  %s5 = inlined_call_operand.<no memory space> [shape: f32[1,1], index: 5, kind: input, shape index: {}, may-alias: {5,7}]
  %s6 = inlined_call_operand.hbm [shape: f32[10,10], index: 6, kind: output, shape index: {0}]
  %s7 = inlined_call_operand.hbm [shape: f32[1,1], index: 7, kind: output, shape index: {1}, may-alias: {5,7}]
  %8 = xla_tuple %s6, %s7
  %s9 = sld [smem:[#allocation0]]
  $region62: #{toy_model_forward.1} parent=0
    _
  %s11 = ssub.s32 1, %s9
  %s12 = scalar_select 0, %s11, %s9
  %v13 = vstv %s5
  %14 = vst [vmem:[#allocation2] sm:$0x1] %v13
  $region1: #{toy_model_forward.1} parent=0
    #allocation3 [shape = 'u8[8192]{0}', space=vmem, size = 0x2000, scoped, tag = 'input window, operand 0, single buffered']
    #allocation4 [shape = 's32[1]{0}', space=sflag, size = 0x4, scoped, tag = 'scoped memory for toy_model_forward.1']
    #allocation5 [shape = 's32[1]{0}', space=sflag, size = 0x4, scoped, tag = 'scoped memory for toy_model_forward.1']
    #allocation6 [shape = 'u8[8192]{0}', space=vmem, size = 0x2000, scoped, tag = 'input window, operand 1, single buffered']
    #allocation7 [shape = 's32[1]{0}', space=sflag, size = 0x4, scoped, tag = 'scoped memory for toy_model_forward.1']
    #allocation8 [shape = 'u8[8192]{0}', space=vmem, size = 0x2000, scoped, tag = 'input window, operand 2, single buffered']
    #allocation9 [shape = 'u8[8192]{0}', space=vmem, size = 0x2000, scoped, tag = 'input window, operand 3, single buffered']
    #allocation10 [shape = 's32[1]{0}', space=sflag, size = 0x4, scoped, tag = 'scoped memory for toy_model_forward.1']
    #allocation11 [shape = 'u8[8192]{0}', space=vmem, size = 0x2000, scoped, tag = 'input window, operand 4, single buffered']
    #allocation12 [shape = 'u8[8192]{0}', space=vmem, size = 0x2000, scoped, tag = 'output window, operand 0, single buffered']
    #allocation13 [shape = 'u8[512]{0}', space=vmem, size = 0x400, scoped, tag = 'output window, operand 1, single buffered']
    #allocation14 [shape = 's32[1]{0}', space=sflag, size = 0x4, scoped, tag = 'scoped memory for toy_model_forward.1']
    %15 = vsyncpa [#allocation4], 0
    %16 = vsyncpa [#allocation7], 0
    %17 = vsyncpa [#allocation10], 0
    %18 = vsyncpa [#allocation5], 0
    %19 = vsyncpa [#allocation14], 0
    // Predicated region
    $region2: #{toy_model_forward.1} parent=1 // pred_check
      _
    $region3: #{toy_model_forward.1} parent=1 // pred_check_branch
      %21 = sbr.rel (0) target = $region5
    $region4: #{toy_model_forward.1} parent=1 // pred_region
      %23 = vsyncadd [#allocation4], 0
      %s24 = sshll.u32 %s0, 4
      %s25 = int_to_ptr.hbm [resolvable:$true] %s24
      %s26 = sshll.u32 [#allocation3], 4
      %s27 = int_to_ptr.vmem [resolvable:$true] %s26
      %32 = dma.hbm_to_vmem [thread:$0]  %s25, 256, %s27, [#allocation4], 128, 128, 8
    $region5: #{toy_model_forward.1} parent=1 // pred_fallthru
      _
    // Predicated region
    $region6: #{toy_model_forward.1} parent=1 // pred_check
      _
    $region7: #{toy_model_forward.1} parent=1 // pred_check_branch
      %34 = sbr.rel (0) target = $region9
    $region8: #{toy_model_forward.1} parent=1 // pred_region
      %36 = vsyncadd [#allocation7], 0
      %s37 = sshll.u32 %s1, 4
      %s38 = int_to_ptr.hbm [resolvable:$true] %s37
      %s39 = sshll.u32 [#allocation6], 4
      %s40 = int_to_ptr.vmem [resolvable:$true] %s39
      %45 = dma.hbm_to_vmem [thread:$0]  %s38, 256, %s40, [#allocation7], 128, 128, 8
    $region9: #{toy_model_forward.1} parent=1 // pred_fallthru
      _
    // Predicated region
    $region10: #{toy_model_forward.1} parent=1 // pred_check
      _
    $region11: #{toy_model_forward.1} parent=1 // pred_check_branch
      %47 = sbr.rel (0) target = $region13
    $region12: #{toy_model_forward.1} parent=1 // pred_region
      %49 = vsyncadd [#allocation7], 0
      %s50 = sshll.u32 %s2, 4
      %s51 = int_to_ptr.hbm [resolvable:$true] %s50
      %s52 = sshll.u32 [#allocation8], 4
      %s53 = int_to_ptr.vmem [resolvable:$true] %s52
      %58 = dma.hbm_to_vmem [thread:$0]  %s51, 256, %s53, [#allocation7], 128, 128, 8
    $region13: #{toy_model_forward.1} parent=1 // pred_fallthru
      _
    // Predicated region
    $region14: #{toy_model_forward.1} parent=1 // pred_check
      _
    $region15: #{toy_model_forward.1} parent=1 // pred_check_branch
      %60 = sbr.rel (0) target = $region17
    $region16: #{toy_model_forward.1} parent=1 // pred_region
      %62 = vsyncadd [#allocation10], 0
      %s63 = sshll.u32 %s3, 4
      %s64 = int_to_ptr.hbm [resolvable:$true] %s63
      %s65 = sshll.u32 [#allocation9], 4
      %s66 = int_to_ptr.vmem [resolvable:$true] %s65
      %71 = dma.hbm_to_vmem [thread:$0]  %s64, 256, %s66, [#allocation10], 128, 128, 8
    $region17: #{toy_model_forward.1} parent=1 // pred_fallthru
      _
    // Predicated region
    $region18: #{toy_model_forward.1} parent=1 // pred_check
      _
    $region19: #{toy_model_forward.1} parent=1 // pred_check_branch
      %73 = sbr.rel (0) target = $region21
    $region20: #{toy_model_forward.1} parent=1 // pred_region
      %75 = vsyncadd [#allocation10], 0
      %s76 = sshll.u32 %s4, 4
      %s77 = int_to_ptr.hbm [resolvable:$true] %s76
      %s78 = sshll.u32 [#allocation11], 4
      %s79 = int_to_ptr.vmem [resolvable:$true] %s78
      %84 = dma.hbm_to_vmem [thread:$0]  %s77, 256, %s79, [#allocation10], 128, 128, 8
    $region21: #{toy_model_forward.1} parent=1 // pred_fallthru
      _
    // Predicated region
    $region22: #{toy_model_forward.1} parent=1 // pred_check
      _
    $region23: #{toy_model_forward.1} parent=1 // pred_check_branch
      %86 = sbr.rel (0) target = $region25
    $region24: #{toy_model_forward.1} parent=1 // pred_region
      _
    $region25: #{toy_model_forward.1} parent=1 // pred_fallthru
      _
    // Predicated region
    $region26: #{toy_model_forward.1} parent=1 // pred_check
      _
    $region27: #{toy_model_forward.1} parent=1 // pred_check_branch
      %88 = sbr.rel (0) target = $region29
    $region28: #{toy_model_forward.1} parent=1 // pred_region
      %90 = dma.done [#allocation4], 256
    $region29: #{toy_model_forward.1} parent=1 // pred_fallthru
      _
    // Predicated region
    $region30: #{toy_model_forward.1} parent=1 // pred_check
      _
    $region31: #{toy_model_forward.1} parent=1 // pred_check_branch
      %92 = sbr.rel (0) target = $region33
    $region32: #{toy_model_forward.1} parent=1 // pred_region
      %94 = dma.done [#allocation7], 256
    $region33: #{toy_model_forward.1} parent=1 // pred_fallthru
      _
    // Predicated region
    $region34: #{toy_model_forward.1} parent=1 // pred_check
      _
    $region35: #{toy_model_forward.1} parent=1 // pred_check_branch
      %96 = sbr.rel (0) target = $region37
    $region36: #{toy_model_forward.1} parent=1 // pred_region
      %98 = dma.done [#allocation7], 256
    $region37: #{toy_model_forward.1} parent=1 // pred_fallthru
      _
    // Predicated region
    $region38: #{toy_model_forward.1} parent=1 // pred_check
      _
    $region39: #{toy_model_forward.1} parent=1 // pred_check_branch
      %100 = sbr.rel (0) target = $region41
    $region40: #{toy_model_forward.1} parent=1 // pred_region
      %102 = dma.done [#allocation10], 256
    $region41: #{toy_model_forward.1} parent=1 // pred_fallthru
      _
    // Predicated region
    $region42: #{toy_model_forward.1} parent=1 // pred_check
      _
    $region43: #{toy_model_forward.1} parent=1 // pred_check_branch
      %104 = sbr.rel (0) target = $region45
    $region44: #{toy_model_forward.1} parent=1 // pred_region
      %106 = dma.done [#allocation10], 256
    $region45: #{toy_model_forward.1} parent=1 // pred_fallthru
      _
    %v107 = vld [vmem:[#allocation3] sm:$0xff]
    %v108 = vld [vmem:[#allocation3 + $0x8] sm:$0x3]
    %v109 = vld [vmem:[#allocation6] sm:$0xff]
    %v110 = vld [vmem:[#allocation6 + $0x8] sm:$0x3]
    %v111 = vld [vmem:[#allocation2] sm:$0x1]
    %vm112 = vcmask 80896
    %v113 = vsel %vm112, %v107, 0.0
    %vm114 = vcmask 74752
    %v115 = vsel %vm114, %v108, 0.0
    %v116 = vadd.f32 %v113, %v115
    %117 = vadd.xlane.f32.xlu0 %v116
    %v118 = vpop.xlane.xlu0 %117
    %v119 = vrot.slane %v118, 4
    %v120 = vadd.f32 %v118, %v119
    %v121 = vrot.slane %v120, 2
    %v122 = vadd.f32 %v120, %v121
    %v123 = vrot.slane %v122, 1
    %v124 = vadd.f32 %v122, %v123
    %s125 = vtos %v124
    %v126 = vsel %vm112, %v109, 0.0
    %v127 = vsel %vm114, %v110, 0.0
    %v128 = vadd.f32 %v126, %v127
    %129 = vadd.xlane.f32.xlu0 %v128
    %v130 = vpop.xlane.xlu0 %129
    %v131 = vrot.slane %v130, 4
    %v132 = vadd.f32 %v130, %v131
    %v133 = vrot.slane %v132, 2
    %v134 = vadd.f32 %v132, %v133
    %v135 = vrot.slane %v134, 1
    %v136 = vadd.f32 %v134, %v135
    %s137 = vtos %v136
    %s138 = sadd.f32 %s125, %s137
    %v139 = vstv %s138
    %v140 = vadd.f32 %v111, %v139
    %vm141 = vcmask 0
    %142 = vst.msk [vmem:[#allocation13] sm:$0x1] %vm141, %v140
    %v143 = vld [vmem:[#allocation11] sm:$0xff]
    %v144 = vld [vmem:[#allocation11 + $0x8] sm:$0x3]
    %v145 = vld [vmem:[#allocation8] sm:$0xff]
    %v146 = vld [vmem:[#allocation8 + $0x8] sm:$0x3]
    %v148 = vsel %vm112, %v107, 0
    %v151 = vsel %vm112, %v108, 0
    %vm153 = vcmask 1041408
    %v155 = vsel %vm153, %v146, 0
    %157 = vmatpush.msra.mxu0 0.0
    %158 = vmatpush.msra.mxu0 0.0
    %159 = vmatpush.msra.mxu0 0.0
    %160 = vmatpush.msra.mxu0 0.0
    %161 = vmatpush.msra.mxu0 0.0
    %162 = vmatpush.msra.mxu0 0.0
    %163 = vmatpush.msra.mxu0 0.0
    %164 = vmatpush.msra.mxu0 0.0
    %165 = vmatpush.msra.mxu0 0.0
    %166 = vmatpush.msra.mxu0 0.0
    %167 = vmatpush.msra.mxu0 0.0
    %168 = vmatpush.msra.mxu0 0.0
    %169 = vmatpush.msra.mxu0 0.0
    %170 = vmatpush.msra.mxu0 0.0
    %171 = vmatpush.msra.mxu0 %v155
    %172 = vmatpush.msra.mxu0 %v145
    %173 = vmatmul.f32.gmra.mxu0 %v148
    %v174 = vpop.f32.mrf.mxu0
    %v175 = vadd.f32 0.0, %v174
    %176 = vmatmul.f32.gmra.mxu0 %v151
    %v177 = vpop.f32.mrf.mxu0
    %v178 = vadd.f32 0.0, %v177
    %179 = vdwg.mxu0
    %v180 = vadd.f32 %v143, %v175
    %v181 = vadd.f32 %v144, %v178
    %v182 = vld [vmem:[#allocation9] sm:$0xff]
    %v183 = vld [vmem:[#allocation9 + $0x8] sm:$0x3]
    %v185 = vsel %vm112, %v109, 0
    %v188 = vsel %vm112, %v110, 0
    %v191 = vsel %vm153, %v183, 0
    %193 = vmatpush.msra.mxu0 0.0
    %194 = vmatpush.msra.mxu0 0.0
    %195 = vmatpush.msra.mxu0 0.0
    %196 = vmatpush.msra.mxu0 0.0
    %197 = vmatpush.msra.mxu0 0.0
    %198 = vmatpush.msra.mxu0 0.0
    %199 = vmatpush.msra.mxu0 0.0
    %200 = vmatpush.msra.mxu0 0.0
    %201 = vmatpush.msra.mxu0 0.0
    %202 = vmatpush.msra.mxu0 0.0
    %203 = vmatpush.msra.mxu0 0.0
    %204 = vmatpush.msra.mxu0 0.0
    %205 = vmatpush.msra.mxu0 0.0
    %206 = vmatpush.msra.mxu0 0.0
    %207 = vmatpush.msra.mxu0 %v191
    %208 = vmatpush.msra.mxu0 %v182
    %209 = vmatmul.f32.gmra.mxu0 %v185
    %v210 = vpop.f32.mrf.mxu0
    %v211 = vadd.f32 0.0, %v210
    %212 = vmatmul.f32.gmra.mxu0 %v188
    %v213 = vpop.f32.mrf.mxu0
    %v214 = vadd.f32 0.0, %v213
    %215 = vdwg.mxu0
    %v216 = vadd.f32 %v180, %v211
    %v217 = vadd.f32 %v181, %v214
    %218 = vst.msk [vmem:[#allocation12] sm:$0xff] %vm112, %v216
    %219 = vst.msk [vmem:[#allocation12 + $0x8] sm:$0x3] %vm114, %v217
    // Predicated region
    $region46: #{toy_model_forward.1} parent=1 // pred_check
      _
    $region47: #{toy_model_forward.1} parent=1 // pred_check_branch
      %221 = sbr.rel (0) target = $region49
    $region48: #{toy_model_forward.1} parent=1 // pred_region
      %223 = vsyncadd [#allocation5], 0
      %s224 = sshll.u32 [#allocation12], 4
      %s225 = int_to_ptr.vmem [resolvable:$true] %s224
      %s226 = sshll.u32 %s6, 4
      %s227 = int_to_ptr.hbm [resolvable:$true] %s226
      %232 = dma.vmem_to_hbm [thread:$0]  %s225, 256, %s227, [#allocation5], 128, 128, 8
    $region49: #{toy_model_forward.1} parent=1 // pred_fallthru
      _
    // Predicated region
    $region50: #{toy_model_forward.1} parent=1 // pred_check
      _
    $region51: #{toy_model_forward.1} parent=1 // pred_check_branch
      %234 = sbr.rel (0) target = $region53
    $region52: #{toy_model_forward.1} parent=1 // pred_region
      %236 = vsyncadd [#allocation14], 0
      %s238 = sshll.u32 [#allocation13], 4
      %s239 = int_to_ptr.vmem [resolvable:$true] %s238
      %s240 = sshll.u32 %s7, 4
      %s241 = int_to_ptr.hbm [resolvable:$true] %s240
      %243 = dma.vmem_to_hbm [thread:$0]  %s239, 16, %s241, [#allocation14]
    $region53: #{toy_model_forward.1} parent=1 // pred_fallthru
      _
    // Predicated region
    $region54: #{toy_model_forward.1} parent=1 // pred_check
      _
    $region55: #{toy_model_forward.1} parent=1 // pred_check_branch
      %245 = sbr.rel (0) target = $region57
    $region56: #{toy_model_forward.1} parent=1 // pred_region
      %247 = dma.done [#allocation5], 256
    $region57: #{toy_model_forward.1} parent=1 // pred_fallthru
      _
    // Predicated region
    $region58: #{toy_model_forward.1} parent=1 // pred_check
      _
    $region59: #{toy_model_forward.1} parent=1 // pred_check_branch
      %249 = sbr.rel (0) target = $region61
    $region60: #{toy_model_forward.1} parent=1 // pred_region
      %251 = dma.done [#allocation14], 16
    $region61: #{toy_model_forward.1} parent=1 // pred_fallthru
      _
    %252 = vsyncpa [#allocation4], 1
    %253 = vsyncpa [#allocation7], 1
    %254 = vsyncpa [#allocation10], 1
    %255 = vsyncpa [#allocation5], 1
    %256 = vsyncpa [#allocation14], 1

</llo_original>
